<compile_context>
chip_gen: v5e
topology: v5e:2x2
jax: 0.10.0
libtpu: 0.0.40
codegen_flags: <defaults>
</compile_context>

<pallas_src>
import functools

import jax
import jax.numpy as jnp
import numpy as np
from jax.experimental import pallas as pl
from jax.experimental.pallas import tpu as pltpu

EPS = 1e-5
LANE = 128
VMEM_LIMIT = 32 * 1024 * 1024  # scoped-VMEM cap that is safe on v5e / v6e / v7x


def _round_up(x, m):
    return (x + m - 1) // m * m


def _pad2(a, rows, cols):
    return jnp.pad(a, ((0, rows - a.shape[0]), (0, cols - a.shape[1])))


# ---------------------------------------------------------------------------
# Pallas kernels
# ---------------------------------------------------------------------------
def _matmul_stats_kernel(p_ref, w_ref, y_ref, sum_ref, sq_ref):
    """y = p @ w (bf16 operands, f32 accumulate) per M-tile; accumulate per-channel
    sum / sum-of-squares across the M grid (axis marked "arbitrary"; sum/sq outputs use a
    constant block index -> VMEM-resident accumulators)."""
    @pl.when(pl.program_id(0) == 0)
    def _():
        sum_ref[...] = jnp.zeros_like(sum_ref)
        sq_ref[...] = jnp.zeros_like(sq_ref)

    y = jnp.dot(p_ref[...], w_ref[...], preferred_element_type=jnp.float32)
    y_ref[...] = y
    sum_ref[...] += jnp.sum(y, axis=0, keepdims=True)
    sq_ref[...] += jnp.sum(y * y, axis=0, keepdims=True)


def _bn_relu_kernel(y_ref, sum_ref, sq_ref, g_ref, b_ref, h_ref, *, inv_count):
    """h = relu(BN(y)); BN folded into one per-channel scale/shift FMA."""
    mean = sum_ref[...] * inv_count
    var = jnp.maximum(sq_ref[...] * inv_count - mean * mean, 0.0)
    scale = g_ref[...] * jax.lax.rsqrt(var + EPS)
    shift = b_ref[...] - mean * scale
    h_ref[...] = jnp.maximum(y_ref[...] * scale + shift, 0.0).astype(h_ref.dtype)


def _bn_proj_add_relu_kernel(y_ref, sum_ref, sq_ref, g_ref, b_ref,
                             s_ref, ssum_ref, ssq_ref, sg_ref, sb_ref,
                             o_ref, *, inv_count):
    """out = relu(BN(conv2) + BN(1x1-conv shortcut))."""
    mean = sum_ref[...] * inv_count
    var = jnp.maximum(sq_ref[...] * inv_count - mean * mean, 0.0)
    scale = g_ref[...] * jax.lax.rsqrt(var + EPS)
    shift = b_ref[...] - mean * scale
    out1 = y_ref[...] * scale + shift

    smean = ssum_ref[...] * inv_count
    svar = jnp.maximum(ssq_ref[...] * inv_count - smean * smean, 0.0)
    sscale = sg_ref[...] * jax.lax.rsqrt(svar + EPS)
    sshift = sb_ref[...] - smean * sscale
    sc = s_ref[...] * sscale + sshift

    o_ref[...] = jnp.maximum(out1 + sc, 0.0)


def _bn_identity_add_relu_kernel(y_ref, sum_ref, sq_ref, g_ref, b_ref,
                                 xs_ref, o_ref, *, inv_count):
    """out = relu(BN(conv2) + x) for the identity shortcut."""
    mean = sum_ref[...] * inv_count
    var = jnp.maximum(sq_ref[...] * inv_count - mean * mean, 0.0)
    scale = g_ref[...] * jax.lax.rsqrt(var + EPS)
    shift = b_ref[...] - mean * scale
    o_ref[...] = jnp.maximum(y_ref[...] * scale + shift + xs_ref[...], 0.0)


# ---------------------------------------------------------------------------
# pallas_call wrappers (grid over the M axis)
# ---------------------------------------------------------------------------
def _row_spec(tm, c):
    return pl.BlockSpec((tm, c), lambda i: (i, 0))


def _chan_spec(c):
    # constant index_map -> small per-channel operands stay resident across grid steps
    return pl.BlockSpec((1, c), lambda i: (0, 0))


def _matmul_stats(patches, weights, tm):
    mp, kp = patches.shape
    cp = weights.shape[1]
    return pl.pallas_call(
        _matmul_stats_kernel,
        grid=(mp // tm,),
        in_specs=[_row_spec(tm, kp),
                  pl.BlockSpec((kp, cp), lambda i: (0, 0))],
        out_specs=(_row_spec(tm, cp), _chan_spec(cp), _chan_spec(cp)),
        out_shape=(jax.ShapeDtypeStruct((mp, cp), jnp.float32),
                   jax.ShapeDtypeStruct((1, cp), jnp.float32),
                   jax.ShapeDtypeStruct((1, cp), jnp.float32)),
        compiler_params=pltpu.CompilerParams(
            dimension_semantics=("arbitrary",),  # stats accumulate across M tiles
            vmem_limit_bytes=VMEM_LIMIT),
    )(patches, weights)


def _bn_relu(y, s, q, g, b, count, tm, out_dtype):
    mp, cp = y.shape
    return pl.pallas_call(
        functools.partial(_bn_relu_kernel, inv_count=1.0 / count),
        grid=(mp // tm,),
        in_specs=[_row_spec(tm, cp)] + [_chan_spec(cp)] * 4,
        out_specs=_row_spec(tm, cp),
        out_shape=jax.ShapeDtypeStruct((mp, cp), out_dtype),
        compiler_params=pltpu.CompilerParams(
            dimension_semantics=("parallel",),
            vmem_limit_bytes=VMEM_LIMIT),
    )(y, s, q, g, b)


def _bn_proj_add_relu(y, s, q, g, b, ysc, ss, qs, gs, bs, count, tm):
    mp, cp = y.shape
    return pl.pallas_call(
        functools.partial(_bn_proj_add_relu_kernel, inv_count=1.0 / count),
        grid=(mp // tm,),
        in_specs=[_row_spec(tm, cp)] + [_chan_spec(cp)] * 4
                 + [_row_spec(tm, cp)] + [_chan_spec(cp)] * 4,
        out_specs=_row_spec(tm, cp),
        out_shape=jax.ShapeDtypeStruct((mp, cp), jnp.float32),
        compiler_params=pltpu.CompilerParams(
            dimension_semantics=("parallel",),
            vmem_limit_bytes=VMEM_LIMIT),
    )(y, s, q, g, b, ysc, ss, qs, gs, bs)


def _bn_identity_add_relu(y, s, q, g, b, xs, count, tm):
    mp, cp = y.shape
    return pl.pallas_call(
        functools.partial(_bn_identity_add_relu_kernel, inv_count=1.0 / count),
        grid=(mp // tm,),
        in_specs=[_row_spec(tm, cp)] + [_chan_spec(cp)] * 4 + [_row_spec(tm, cp)],
        out_specs=_row_spec(tm, cp),
        out_shape=jax.ShapeDtypeStruct((mp, cp), jnp.float32),
        compiler_params=pltpu.CompilerParams(
            dimension_semantics=("parallel",),
            vmem_limit_bytes=VMEM_LIMIT),
    )(y, s, q, g, b, xs)


# ---------------------------------------------------------------------------
# Plain-JAX glue: im2col, tile-size choice, parameters, layout transposes
# ---------------------------------------------------------------------------
def _im2col(x_nhwc, k, stride, pad):
    """x: (N,H,W,C) -> patches (N*Ho*Wo, k*k*C); column order = (kh, kw, c)."""
    N, H, W, C = x_nhwc.shape
    Ho = (H + 2 * pad - k) // stride + 1
    Wo = (W + 2 * pad - k) // stride + 1
    xp = jnp.pad(x_nhwc, ((0, 0), (pad, pad), (pad, pad), (0, 0)))
    cols = []
    for kh in range(k):
        for kw in range(k):
            cols.append(xp[:, kh:kh + (Ho - 1) * stride + 1:stride,
                            kw:kw + (Wo - 1) * stride + 1:stride, :])
    patches = jnp.concatenate(cols, axis=-1)
    return patches.reshape(N * Ho * Wo, k * k * C), (N, Ho, Wo)


def _choose_tm(m, k_pad, c_pad):
    """Largest M-tile (multiple of 128) whose double-buffered working set stays well under
    the smallest per-generation scoped-VMEM budget (v5e 16 MiB ... v7x 64 MiB physical)."""
    budget = 8 * 1024 * 1024
    # 2x-buffered bf16 patches tile + 2x-buffered f32 matmul-result tiles (in & out)
    bytes_per_row = 2 * 2 * k_pad + 2 * 4 * c_pad + 2 * 4 * c_pad
    tm = budget // max(bytes_per_row, 1)
    tm = max(128, min(2048, (tm // 128) * 128))
    return min(tm, _round_up(m, 128))


def init_params(key, cin, cout):
    ks = jax.random.split(key, 12)
    f32 = jnp.float32
    return {
        # conv1: 3x3, with bias (HWIO)
        "w1": 0.1 * jax.random.normal(ks[0], (3, 3, cin, cout), f32),
        "b1": 0.1 * jax.random.normal(ks[1], (1, cout), f32),
        "g1": 1.0 + 0.1 * jax.random.normal(ks[2], (1, cout), f32),
        "bt1": 0.1 * jax.random.normal(ks[3], (1, cout), f32),
        # conv2: 3x3, with bias
        "w2": 0.1 * jax.random.normal(ks[4], (3, 3, cout, cout), f32),
        "b2": 0.1 * jax.random.normal(ks[5], (1, cout), f32),
        "g2": 1.0 + 0.1 * jax.random.normal(ks[6], (1, cout), f32),
        "bt2": 0.1 * jax.random.normal(ks[7], (1, cout), f32),
        # shortcut: 1x1 conv (no bias) + BN
        "ws": 0.1 * jax.random.normal(ks[8], (cin, cout), f32),
        "gs": 1.0 + 0.1 * jax.random.normal(ks[9], (1, cout), f32),
        "bts": 0.1 * jax.random.normal(ks[10], (1, cout), f32),
    }


def residual_block_forward(params, x_nchw, stride=1, tm=None):
    N, cin, H, W = x_nchw.shape
    cout = params["w1"].shape[-1]
    cp = _round_up(cout, LANE)

    x = jnp.transpose(x_nchw, (0, 2, 3, 1)).astype(jnp.float32)  # NHWC

    # ---- stage 1: conv3x3(stride) + BN + ReLU -------------------------------
    p1, (N, Ho, Wo) = _im2col(x, 3, stride, 1)
    M = N * Ho * Wo
    k1 = p1.shape[1]
    k1p = _round_up(k1, LANE)
    k2p = _round_up(9 * cout, LANE)

    if tm is None:
        tm = _choose_tm(M, max(k1p, k2p), cp)
    mp = _round_up(M, tm)

    # Zero row/K/channel padding is stats-safe: padded rows/channels produce exact zeros
    # (no conv bias inside the kernels), so the accumulated sums are unaffected; we divide
    # by the true M and slice padding off at the end.
    p1b = _pad2(p1, mp, k1p).astype(jnp.bfloat16)
    w1f = _pad2(params["w1"].reshape(k1, cout), k1p, cp).astype(jnp.bfloat16)
    g1 = _pad2(params["g1"], 1, cp)
    bt1 = _pad2(params["bt1"], 1, cp)
    # NOTE: conv biases b1/b2 are intentionally NOT fed to the kernels: batch-stats BN
    # subtracts the batch mean right after, cancelling a per-channel bias exactly.

    y1, s1, q1 = _matmul_stats(p1b, w1f, tm)
    h = _bn_relu(y1, s1, q1, g1, bt1, float(M), tm, jnp.bfloat16)   # (mp, cp) bf16

    # ---- stage 2: conv3x3 + BN, shortcut, add, ReLU -------------------------
    h_nhwc = h[:M, :cout].reshape(N, Ho, Wo, cout)
    p2, _ = _im2col(h_nhwc, 3, 1, 1)
    p2b = _pad2(p2, mp, k2p).astype(jnp.bfloat16)
    w2f = _pad2(params["w2"].reshape(9 * cout, cout), k2p, cp).astype(jnp.bfloat16)
    g2 = _pad2(params["g2"], 1, cp)
    bt2 = _pad2(params["bt2"], 1, cp)

    y2, s2, q2 = _matmul_stats(p2b, w2f, tm)

    need_projection = (stride != 1) or (cin != cout)
    if need_projection:
        # 1x1 conv with stride s == spatial subsample, then matmul over channels
        xs = x[:, ::stride, ::stride, :].reshape(M, cin)
        ksp = _round_up(cin, LANE)
        xsb = _pad2(xs, mp, ksp).astype(jnp.bfloat16)
        wsf = _pad2(params["ws"], ksp, cp).astype(jnp.bfloat16)
        gs = _pad2(params["gs"], 1, cp)
        bts = _pad2(params["bts"], 1, cp)
        ysc, ss, qs = _matmul_stats(xsb, wsf, tm)
        out = _bn_proj_add_relu(y2, s2, q2, g2, bt2,
                                ysc, ss, qs, gs, bts, float(M), tm)
    else:
        xs = _pad2(x.reshape(M, cin), mp, cp)   # identity shortcut kept in f32
        out = _bn_identity_add_relu(y2, s2, q2, g2, bt2, xs, float(M), tm)

    out = out[:M, :cout].reshape(N, Ho, Wo, cout)
    return jnp.transpose(out, (0, 3, 1, 2))  # back to NCHW


# ---------------------------------------------------------------------------
# Pure-JAX f32 reference (PyTorch semantics, biases included)
# ---------------------------------------------------------------------------
def reference_forward(params, x_nchw, stride=1):
    x = x_nchw.astype(jnp.float32)
    cin = x.shape[1]
    cout = params["w1"].shape[-1]

    def conv(inp, w, b, s, pad):
        out = jax.lax.conv_general_dilated(
            inp, w, (s, s), ((pad, pad), (pad, pad)),
            dimension_numbers=("NCHW", "HWIO", "NCHW"))
        if b is not None:
            out = out + b.reshape(1, -1, 1, 1)
        return out

    def bn(inp, g, bt):
        mean = jnp.mean(inp, axis=(0, 2, 3), keepdims=True)
        var = jnp.mean(jnp.square(inp - mean), axis=(0, 2, 3), keepdims=True)
        return (inp - mean) * jax.lax.rsqrt(var + EPS) * g.reshape(1, -1, 1, 1) \
            + bt.reshape(1, -1, 1, 1)

    h = jax.nn.relu(bn(conv(x, params["w1"], params["b1"], stride, 1),
                       params["g1"], params["bt1"]))
    out1 = bn(conv(h, params["w2"], params["b2"], 1, 1), params["g2"], params["bt2"])
    if stride != 1 or cin != cout:
        ws4 = params["ws"].reshape(1, 1, cin, cout)
        sc = bn(conv(x, ws4, None, stride, 0), params["gs"], params["bts"])
    else:
        sc = x
    return jax.nn.relu(sc + out1)


if __name__ == "__main__":
    key = jax.random.PRNGKey(0)
    k_x1, k_p1, k_x2, k_p2, k_x3, k_p3 = jax.random.split(key, 6)

    # 1) projection shortcut (cin != cout), stride 1; explicit small tile -> 4-step M grid
    N, CIN, H, W, COUT, STRIDE = 2, 4, 16, 16, 8, 1
    x1 = jax.random.normal(k_x1, (N, CIN, H, W), jnp.float32)
    params1 = init_params(k_p1, CIN, COUT)
    out1 = jax.block_until_ready(residual_block_forward(params1, x1, stride=STRIDE, tm=128))
    ref1 = jax.block_until_ready(reference_forward(params1, x1, stride=STRIDE))
    assert out1.shape == (N, COUT, H // STRIDE, W // STRIDE), out1.shape
    assert out1.dtype == jnp.float32
    np.testing.assert_allclose(np.asarray(out1), np.asarray(ref1), rtol=5e-2, atol=5e-2)

    # 2) identity shortcut (cin == cout, stride 1); auto tile size
    x2 = jax.random.normal(k_x2, (2, 8, 16, 16), jnp.float32)
    params2 = init_params(k_p2, 8, 8)
    out2 = jax.block_until_ready(residual_block_forward(params2, x2, stride=1))
    ref2 = jax.block_until_ready(reference_forward(params2, x2, stride=1))
    assert out2.shape == (2, 8, 16, 16), out2.shape
    np.testing.assert_allclose(np.asarray(out2), np.asarray(ref2), rtol=5e-2, atol=5e-2)

    # 3) strided projection shortcut (stride 2)
    x3 = jax.random.normal(k_x3, (2, 4, 16, 16), jnp.float32)
    params3 = init_params(k_p3, 4, 8)
    out3 = jax.block_until_ready(residual_block_forward(params3, x3, stride=2))
    ref3 = jax.block_until_ready(reference_forward(params3, x3, stride=2))
    assert out3.shape == (2, 8, 8, 8), out3.shape
    np.testing.assert_allclose(np.asarray(out3), np.asarray(ref3), rtol=5e-2, atol=5e-2)

    print("KERNEL_OK")
</pallas_src>

<mosaic_0001>
module attributes {stable_mosaic.version = 11 : i64} {
  func.func @_matmul_stats_kernel(%arg0: i32, %arg1: memref<128x128xbf16, #tpu.memory_space<vmem>>, %arg2: memref<128x128xbf16, #tpu.memory_space<vmem>>, %arg3: memref<128x128xf32, #tpu.memory_space<vmem>>, %arg4: memref<1x128xf32, #tpu.memory_space<vmem>>, %arg5: memref<1x128xf32, #tpu.memory_space<vmem>>) attributes {dimension_semantics = [#tpu.dimension_semantics<arbitrary>], iteration_bounds = array<i64: 4>, scalar_prefetch = 0 : i64, scratch_operands = 0 : i64, tpu.core_type = #tpu.core_type<tc>, window_params = [{transform_indices = @transform_0, window_bounds = array<i64: 128, 128>}, {pipeline_mode = #tpu.pipeline_mode<synchronous>, transform_indices = @transform_1, window_bounds = array<i64: 128, 128>}, {transform_indices = @transform_2, window_bounds = array<i64: 128, 128>}, {pipeline_mode = #tpu.pipeline_mode<synchronous>, transform_indices = @transform_3, window_bounds = array<i64: 1, 128>}, {pipeline_mode = #tpu.pipeline_mode<synchronous>, transform_indices = @transform_4, window_bounds = array<i64: 1, 128>}]} {
    %c0_i32 = arith.constant 0 : i32
    %0 = arith.cmpi eq, %arg0, %c0_i32 : i32
    %1 = arith.extui %0 : i1 to i32
    %c0_i32_0 = arith.constant 0 : i32
    %2 = arith.cmpi ne, %1, %c0_i32_0 : i32
    scf.if %2 {
      %cst_16 = arith.constant 0.000000e+00 : f32
      %18 = vector.broadcast %cst_16 : f32 to vector<1x128xf32>
      %c0_17 = arith.constant 0 : index
      %c0_18 = arith.constant 0 : index
      %19 = vector.load %arg4[%c0_17, %c0_18] : memref<1x128xf32, #tpu.memory_space<vmem>>, vector<1x128xf32>
      tpu.vector_store %arg4[%c0_17, %c0_18], %18 {strides = array<i32>} : memref<1x128xf32, #tpu.memory_space<vmem>>, vector<1x128xf32>,
      %cst_19 = arith.constant 0.000000e+00 : f32
      %20 = vector.broadcast %cst_19 : f32 to vector<1x128xf32>
      %c0_20 = arith.constant 0 : index
      %c0_21 = arith.constant 0 : index
      %21 = vector.load %arg5[%c0_20, %c0_21] : memref<1x128xf32, #tpu.memory_space<vmem>>, vector<1x128xf32>
      tpu.vector_store %arg5[%c0_20, %c0_21], %20 {strides = array<i32>} : memref<1x128xf32, #tpu.memory_space<vmem>>, vector<1x128xf32>,
    } else {
    }
    %c0 = arith.constant 0 : index
    %c0_1 = arith.constant 0 : index
    %3 = vector.load %arg1[%c0, %c0_1] : memref<128x128xbf16, #tpu.memory_space<vmem>>, vector<128x128xbf16>
    %c0_2 = arith.constant 0 : index
    %c0_3 = arith.constant 0 : index
    %4 = vector.load %arg2[%c0_2, %c0_3] : memref<128x128xbf16, #tpu.memory_space<vmem>>, vector<128x128xbf16>
    %cst = arith.constant dense<0.000000e+00> : vector<128x128xf32>
    %5 = tpu.matmul %3, %4, %cst {dimension_numbers = #tpu.dot_dimension_numbers<[1], [0], [0], [1], [0, 0, 1, 1], [], []>} : vector<128x128xbf16>, vector<128x128xbf16>, vector<128x128xf32> -> vector<128x128xf32>
    %c0_4 = arith.constant 0 : index
    %c0_5 = arith.constant 0 : index
    %6 = vector.load %arg3[%c0_4, %c0_5] : memref<128x128xf32, #tpu.memory_space<vmem>>, vector<128x128xf32>
    tpu.vector_store %arg3[%c0_4, %c0_5], %5 {strides = array<i32>} : memref<128x128xf32, #tpu.memory_space<vmem>>, vector<128x128xf32>,
    %c0_6 = arith.constant 0 : index
    %c0_7 = arith.constant 0 : index
    %7 = vector.load %arg4[%c0_6, %c0_7] : memref<1x128xf32, #tpu.memory_space<vmem>>, vector<1x128xf32>
    %cst_8 = arith.constant dense<0.000000e+00> : vector<128xf32>
    %8 = vector.multi_reduction <add>, %5, %cst_8 [0] : vector<128x128xf32> to vector<128xf32>
    %9 = vector.shape_cast %8 : vector<128xf32> to vector<1x128xf32>
    %10 = arith.addf %7, %9 : vector<1x128xf32>
    %c0_9 = arith.constant 0 : index
    %c0_10 = arith.constant 0 : index
    %11 = vector.load %arg4[%c0_9, %c0_10] : memref<1x128xf32, #tpu.memory_space<vmem>>, vector<1x128xf32>
    tpu.vector_store %arg4[%c0_9, %c0_10], %10 {strides = array<i32>} : memref<1x128xf32, #tpu.memory_space<vmem>>, vector<1x128xf32>,
    %c0_11 = arith.constant 0 : index
    %c0_12 = arith.constant 0 : index
    %12 = vector.load %arg5[%c0_11, %c0_12] : memref<1x128xf32, #tpu.memory_space<vmem>>, vector<1x128xf32>
    %13 = arith.mulf %5, %5 : vector<128x128xf32>
    %cst_13 = arith.constant dense<0.000000e+00> : vector<128xf32>
    %14 = vector.multi_reduction <add>, %13, %cst_13 [0] : vector<128x128xf32> to vector<128xf32>
    %15 = vector.shape_cast %14 : vector<128xf32> to vector<1x128xf32>
    %16 = arith.addf %12, %15 : vector<1x128xf32>
    %c0_14 = arith.constant 0 : index
    %c0_15 = arith.constant 0 : index
    %17 = vector.load %arg5[%c0_14, %c0_15] : memref<1x128xf32, #tpu.memory_space<vmem>>, vector<1x128xf32>
    tpu.vector_store %arg5[%c0_14, %c0_15], %16 {strides = array<i32>} : memref<1x128xf32, #tpu.memory_space<vmem>>, vector<1x128xf32>,
    return
  }
  func.func @transform_0(%arg0: i32) -> (i32, i32) {
    %c0_i32 = arith.constant 0 : i32
    %c0_i32_0 = arith.constant 0 : i32
    return %arg0, %c0_i32 : i32, i32
  }
  func.func @transform_1(%arg0: i32) -> (i32, i32) {
    %c0_i32 = arith.constant 0 : i32
    %c0_i32_0 = arith.constant 0 : i32
    %c0_i32_1 = arith.constant 0 : i32
    return %c0_i32, %c0_i32_0 : i32, i32
  }
  func.func @transform_2(%arg0: i32) -> (i32, i32) {
    %c0_i32 = arith.constant 0 : i32
    %c0_i32_0 = arith.constant 0 : i32
    return %arg0, %c0_i32 : i32, i32
  }
  func.func @transform_3(%arg0: i32) -> (i32, i32) {
    %c0_i32 = arith.constant 0 : i32
    %c0_i32_0 = arith.constant 0 : i32
    %c0_i32_1 = arith.constant 0 : i32
    return %c0_i32, %c0_i32_0 : i32, i32
  }
  func.func @transform_4(%arg0: i32) -> (i32, i32) {
    %c0_i32 = arith.constant 0 : i32
    %c0_i32_0 = arith.constant 0 : i32
    %c0_i32_1 = arith.constant 0 : i32
    return %c0_i32, %c0_i32_0 : i32, i32
  }
}

</mosaic_0001>

<llo_original>
// kernel: tpu_custom_call.1
$region0: #{tpu_custom_call.1}
  #allocation0 [shape = 'u32[]', space=smem, size = 0x4, offset = 0x4, fixed_abs, tag = 'smem constant byte address 0x4 - core index']
  #allocation1 [shape = 'u32[72,128]{1,0:T(1,128)}', space=vmem, size = 0x9000, scoped, tag = 'internal scratch']
  %s0 = inlined_call_operand.hbm [shape: bf16[512,128], index: 0, kind: input, shape index: {}]
  %s1 = inlined_call_operand.hbm [shape: bf16[128,128], index: 1, kind: input, shape index: {}]
  %s2 = inlined_call_operand.hbm [shape: f32[512,128], index: 2, kind: output, shape index: {0}]
  %s3 = inlined_call_operand.hbm [shape: f32[1,128], index: 3, kind: output, shape index: {1}]
  %s4 = inlined_call_operand.hbm [shape: f32[1,128], index: 4, kind: output, shape index: {2}]
  %5 = xla_tuple %s2, %s3, %s4
  %s6 = sld [smem:[#allocation0]]
  $region69: #{tpu_custom_call.1} parent=0
    _
  %s8 = ssub.s32 1, %s6
  %s9 = scalar_select 0, %s8, %s6
  $region1: #{tpu_custom_call.1} parent=0
    #allocation2 [shape = 'u8[65536]{0}', space=vmem, size = 0x10000, scoped, tag = 'input window, operand 0']
    #allocation3 [shape = 's32[2]{0}', space=sflag, size = 0x8, scoped, tag = 'scoped memory for tpu_custom_call.1']
    #allocation4 [shape = 's32[2]{0}', space=sflag, size = 0x8, scoped, tag = 'scoped memory for tpu_custom_call.1']
    #allocation5 [shape = 'u8[32768]{0}', space=vmem, size = 0x8000, scoped, tag = 'input window, operand 1, single buffered']
    #allocation6 [shape = 's32[1]{0}', space=sflag, size = 0x4, scoped, tag = 'scoped memory for tpu_custom_call.1']
    #allocation7 [shape = 'u8[131072]{0}', space=vmem, size = 0x20000, scoped, tag = 'output window, operand 0']
    #allocation8 [shape = 'u8[512]{0}', space=vmem, size = 0x400, scoped, tag = 'output window, operand 1, single buffered']
    #allocation9 [shape = 's32[1]{0}', space=sflag, size = 0x4, scoped, tag = 'scoped memory for tpu_custom_call.1']
    #allocation10 [shape = 'u8[512]{0}', space=vmem, size = 0x400, scoped, tag = 'output window, operand 2, single buffered']
    %10 = vsyncpa [#allocation3], 0
    %s11 = scalar_lea.sflag [#allocation3], 1
    %12 = vsyncpa %s11, 0
    %13 = vsyncpa [#allocation6], 0
    %14 = vsyncpa [#allocation4], 0
    %s15 = scalar_lea.sflag [#allocation4], 1
    %16 = vsyncpa %s15, 0
    %17 = vsyncpa [#allocation9], 0
    loop: start=0, step=1, limit=6
    $region2: #{tpu_custom_call.1} parent=1 // loop_pre_header
      _
    $region3: #{tpu_custom_call.1} parent=1 // loop_header
      %s19 = sphi 0, %s23
      %p20 = scmp.ge.s32.totalorder %s19, 6
      %s29 = sphi 0, %s31
      %s32 = sphi 0, %s29
      %s33 = sphi 0, %s32
      %s49 = sphi 0, %s33
      %s53 = sphi 0, %s53
      %s55 = sphi 0, %s53
      %s56 = sphi 0, %s55
      %s70 = sphi 0, %s56
      %s76 = sphi 0, %s78
      %s79 = sphi 0, %s76
      %s80 = sphi 0, %s79
      %s96 = sphi 0, %s80
      %s100 = sphi 0, %s100
      %s102 = sphi 0, %s100
      %s103 = sphi 0, %s102
      %s117 = sphi 0, %s103
      %s121 = sphi 0, %s121
      %s123 = sphi 0, %s121
      %s124 = sphi 0, %s123
      %s138 = sphi 0, %s124
    $region4: #{tpu_custom_call.1} parent=1 // loop_header_branch
      %22 = sbr.rel (%p20) target = $region8
    $region5: #{tpu_custom_call.1} parent=1 // loop_body
      %s24 = ssub.s32 %s19, 1
      %s25 = ssub.s32 %s19, 2
      %s26 = sadd.s32 %s19, 1
      %s27 = ssub.s32 %s19, %s26
      %p28 = scmp.eq.s32.totalorder %s27, 0
      %s30 = sadd.s32 %s29, 1
      %s31 = scalar_select %p28, %s29, %s30
      %p34 = pneg %p28
      %p35 = scmp.eq.s32.totalorder %s19, 3
      %p36 = por %p34, %p35
      %p37 = scmp.ne.s32.totalorder %s29, %s32
      %p38 = scmp.eq.s32.totalorder %s19, 0
      %p39 = por %p37, %p38
      %p40 = scmp.ne.s32.totalorder %s29, %s32
      %p41 = scmp.eq.s32.totalorder %s24, 3
      %p42 = por %p40, %p41
      %p43 = scmp.ne.s32.totalorder %s32, %s33
      %p44 = scmp.eq.s32.totalorder %s24, 0
      %p45 = por %p43, %p44
      %p46 = scmp.ne.s32.totalorder %s32, %s33
      %p47 = scmp.eq.s32.totalorder %s25, 3
      %p48 = por %p46, %p47
      %p50 = scmp.ne.s32.totalorder %s33, %s49
      %p51 = scmp.eq.s32.totalorder %s25, 0
      %p52 = por %p50, %p51
      %s54 = sadd.s32 %s53, 1
      %p57 = scmp.eq.s32.totalorder %s19, 3
      %p58 = scmp.ne.s32.totalorder %s53, %s55
      %p59 = scmp.eq.s32.totalorder %s19, 0
      %p60 = por %p58, %p59
      %p61 = scmp.ne.s32.totalorder %s53, %s55
      %p62 = scmp.eq.s32.totalorder %s24, 3
      %p63 = por %p61, %p62
      %p64 = scmp.ne.s32.totalorder %s55, %s56
      %p65 = scmp.eq.s32.totalorder %s24, 0
      %p66 = por %p64, %p65
      %p67 = scmp.ne.s32.totalorder %s55, %s56
      %p68 = scmp.eq.s32.totalorder %s25, 3
      %p69 = por %p67, %p68
      %p71 = scmp.ne.s32.totalorder %s56, %s70
      %p72 = scmp.eq.s32.totalorder %s25, 0
      %p73 = por %p71, %p72
      %s74 = ssub.s32 %s19, %s26
      %p75 = scmp.eq.s32.totalorder %s74, 0
      %s77 = sadd.s32 %s76, 1
      %s78 = scalar_select %p75, %s76, %s77
      %p81 = pneg %p75
      %p82 = scmp.eq.s32.totalorder %s19, 3
      %p83 = por %p81, %p82
      %p84 = scmp.ne.s32.totalorder %s76, %s79
      %p85 = scmp.eq.s32.totalorder %s19, 0
      %p86 = por %p84, %p85
      %p87 = scmp.ne.s32.totalorder %s76, %s79
      %p88 = scmp.eq.s32.totalorder %s24, 3
      %p89 = por %p87, %p88
      %p90 = scmp.ne.s32.totalorder %s79, %s80
      %p91 = scmp.eq.s32.totalorder %s24, 0
      %p92 = por %p90, %p91
      %p93 = scmp.ne.s32.totalorder %s79, %s80
      %p94 = scmp.eq.s32.totalorder %s25, 3
      %p95 = por %p93, %p94
      %p97 = scmp.ne.s32.totalorder %s80, %s96
      %p98 = scmp.eq.s32.totalorder %s25, 0
      %p99 = por %p97, %p98
      %s101 = sadd.s32 %s100, 1
      %p104 = scmp.eq.s32.totalorder %s19, 3
      %p105 = scmp.ne.s32.totalorder %s100, %s102
      %p106 = scmp.eq.s32.totalorder %s19, 0
      %p107 = por %p105, %p106
      %p108 = scmp.ne.s32.totalorder %s100, %s102
      %p109 = scmp.eq.s32.totalorder %s24, 3
      %p110 = por %p108, %p109
      %p111 = scmp.ne.s32.totalorder %s102, %s103
      %p112 = scmp.eq.s32.totalorder %s24, 0
      %p113 = por %p111, %p112
      %p114 = scmp.ne.s32.totalorder %s102, %s103
      %p115 = scmp.eq.s32.totalorder %s25, 3
      %p116 = por %p114, %p115
      %p118 = scmp.ne.s32.totalorder %s103, %s117
      %p119 = scmp.eq.s32.totalorder %s25, 0
      %p120 = por %p118, %p119
      %s122 = sadd.s32 %s121, 1
      %p125 = scmp.eq.s32.totalorder %s19, 3
      %p126 = scmp.ne.s32.totalorder %s121, %s123
      %p127 = scmp.eq.s32.totalorder %s19, 0
      %p128 = por %p126, %p127
      %p129 = scmp.ne.s32.totalorder %s121, %s123
      %p130 = scmp.eq.s32.totalorder %s24, 3
      %p131 = por %p129, %p130
      %p132 = scmp.ne.s32.totalorder %s123, %s124
      %p133 = scmp.eq.s32.totalorder %s24, 0
      %p134 = por %p132, %p133
      %p135 = scmp.ne.s32.totalorder %s123, %s124
      %p136 = scmp.eq.s32.totalorder %s25, 3
      %p137 = por %p135, %p136
      %p139 = scmp.ne.s32.totalorder %s124, %s138
      %p140 = scmp.eq.s32.totalorder %s25, 0
      %p141 = por %p139, %p140
      %p142 = scmp.le.s32.totalorder 1, %s19
      %p143 = scmp.lt.s32.totalorder %s19, 5
      %p144 = pnand %p142, %p143
      %p145 = pneg %p144
      // Predicated region
      $region9: #{tpu_custom_call.1} parent=5 // pred_check
        _
      $region10: #{tpu_custom_call.1} parent=5 // pred_check_branch
        %147 = sbr.rel (%p144) target = $region12
      $region11: #{tpu_custom_call.1} parent=5 // pred_region
        %s148 = ssub.s32 %s19, 1
        // Predicated region
        $region13: #{tpu_custom_call.1} parent=11 // pred_check
          %p149 = pneg %p66
        $region14: #{tpu_custom_call.1} parent=11 // pred_check_branch
          %151 = sbr.rel (%p149) target = $region16
        $region15: #{tpu_custom_call.1} parent=11 // pred_region
          %153 = vsyncadd [#allocation6], 0
          %s154 = sshll.u32 %s1, 4
          %s155 = int_to_ptr.hbm [resolvable:$true] %s154
          %s156 = sshll.u32 [#allocation5], 4
          %s157 = int_to_ptr.vmem [resolvable:$true] %s156
          %162 = dma.hbm_to_vmem [thread:$0]  %s155, 1024, %s157, [#allocation6], 64, 64, 4
        $region16: #{tpu_custom_call.1} parent=11 // pred_fallthru
          _
      $region12: #{tpu_custom_call.1} parent=5 // pred_fallthru
        _
      %p163 = scmp.lt.s32.totalorder %s19, 4
      // Predicated region
      $region17: #{tpu_custom_call.1} parent=5 // pred_check
        %p164 = pneg %p163
      $region18: #{tpu_custom_call.1} parent=5 // pred_check_branch
        %166 = sbr.rel (%p164) target = $region20
      $region19: #{tpu_custom_call.1} parent=5 // pred_region
        // Predicated region
        $region21: #{tpu_custom_call.1} parent=19 // pred_check
          %p167 = pneg %p39
        $region22: #{tpu_custom_call.1} parent=19 // pred_check_branch
          %169 = sbr.rel (%p167) target = $region24
        $region23: #{tpu_custom_call.1} parent=19 // pred_region
          %s170 = sand.u32 %s29, 1
          %s171 = scalar_lea.sflag [#allocation3], %s170
          %s172 = sand.u32 %s29, 1
          %s173 = smul.addr %s172, 64
          %s174 = scalar_lea.vmem [#allocation2], %s173
          %s175 = smul.u32 16, %s19
          %177 = vsyncadd %s171, 0
          %s178 = smul.addr %s175, 4
          %s179 = scalar_lea.hbm %s0, %s178
          %s180 = sshll.u32 %s179, 4
          %s181 = int_to_ptr.hbm [resolvable:$true] %s180
          %s182 = sshll.u32 %s174, 4
          %s183 = int_to_ptr.vmem [resolvable:$true] %s182
          %188 = dma.hbm_to_vmem [thread:$0]  %s181, 1024, %s183, %s171, 64, 64, 4
        $region24: #{tpu_custom_call.1} parent=19 // pred_fallthru
          _
      $region20: #{tpu_custom_call.1} parent=5 // pred_fallthru
        _
      %p189 = scmp.le.s32.totalorder 1, %s19
      %p190 = scmp.lt.s32.totalorder %s19, 5
      %p191 = pnand %p189, %p190
      %p192 = pneg %p191
      // Predicated region
      $region25: #{tpu_custom_call.1} parent=5 // pred_check
        _
      $region26: #{tpu_custom_call.1} parent=5 // pred_check_branch
        %194 = sbr.rel (%p191) target = $region28
      $region27: #{tpu_custom_call.1} parent=5 // pred_region
        %s195 = ssub.s32 %s19, 1
        %s196 = sand.u32 %s32, 1
        %s197 = scalar_lea.sflag [#allocation3], %s196
        %s198 = sand.u32 %s32, 1
        %s199 = smul.addr %s198, 64
        %s200 = scalar_lea.vmem [#allocation2], %s199
        // Predicated region
        $region29: #{tpu_custom_call.1} parent=27 // pred_check
          %p201 = pneg %p45
        $region30: #{tpu_custom_call.1} parent=27 // pred_check_branch
          %203 = sbr.rel (%p201) target = $region32
        $region31: #{tpu_custom_call.1} parent=27 // pred_region
          %205 = dma.done %s197, 1024
        $region32: #{tpu_custom_call.1} parent=27 // pred_fallthru
          _
        // Predicated region
        $region33: #{tpu_custom_call.1} parent=27 // pred_check
          %p206 = pneg %p66
        $region34: #{tpu_custom_call.1} parent=27 // pred_check_branch
          %208 = sbr.rel (%p206) target = $region36
        $region35: #{tpu_custom_call.1} parent=27 // pred_region
          %210 = dma.done [#allocation6], 1024
        $region36: #{tpu_custom_call.1} parent=27 // pred_fallthru
          _
        %s211 = sand.u32 %s32, 1
        %s212 = scalar_lea.sflag [#allocation3], %s211
        %s213 = sand.u32 %s32, 1
        %s214 = smul.addr %s213, 64
        %s215 = scalar_lea.vmem [#allocation2], %s214
        %p216 = pneg %p45
        %p217 = pneg %p42
        %p218 = pneg %p66
        %p219 = pneg %p63
        %p220 = pneg %p92
        %p221 = pneg %p89
        %s222 = sand.u32 %s79, 1
        %s223 = scalar_lea.sflag [#allocation4], %s222
        %s224 = sand.u32 %s79, 1
        %s225 = smul.addr %s224, 128
        %s226 = scalar_lea.vmem [#allocation7], %s225
        %p227 = pneg %p113
        %p228 = pneg %p110
        %p229 = pneg %p134
        %p230 = pneg %p131
        %s231 = smul.u32 16, %s24
        %s232 = smul.u32 16, %s24
        %p233 = scmp.eq.s32.totalorder %s24, 0
        // Predicated region
        $region37: #{tpu_custom_call.1} parent=27 // pred_check
          %p234 = pneg %p233
        $region38: #{tpu_custom_call.1} parent=27 // pred_check_branch
          %236 = sbr.rel (%p234) target = $region40
        $region39: #{tpu_custom_call.1} parent=27 // pred_region
          %237 = vst [vmem:[#allocation8] sm:$0x1] 0.0
          %238 = vst [vmem:[#allocation10] sm:$0x1] 0.0
        $region40: #{tpu_custom_call.1} parent=27 // pred_fallthru
          _
        %v239 = vld [vmem:[%s200] sm:$0xf]
        %v240 = vld [vmem:[%s200 + $0x4] sm:$0xf]
        %v241 = vld [vmem:[%s200 + $0x8] sm:$0xf]
        %v242 = vld [vmem:[%s200 + $0xc] sm:$0xf]
        %v243 = vld [vmem:[%s200 + $0x10] sm:$0xf]
        %v244 = vld [vmem:[%s200 + $0x14] sm:$0xf]
        %v245 = vld [vmem:[%s200 + $0x18] sm:$0xf]
        %v246 = vld [vmem:[%s200 + $0x1c] sm:$0xf]
        %v247 = vld [vmem:[%s200 + $0x20] sm:$0xf]
        %v248 = vld [vmem:[%s200 + $0x24] sm:$0xf]
        %v249 = vld [vmem:[%s200 + $0x28] sm:$0xf]
        %v250 = vld [vmem:[%s200 + $0x2c] sm:$0xf]
        %v251 = vld [vmem:[%s200 + $0x30] sm:$0xf]
        %v252 = vld [vmem:[%s200 + $0x34] sm:$0xf]
        %v253 = vld [vmem:[%s200 + $0x38] sm:$0xf]
        %v254 = vld [vmem:[%s200 + $0x3c] sm:$0xf]
        %v255 = vld [vmem:[#allocation5] sm:$0xf]
        %v256 = vld [vmem:[#allocation5 + $0x4] sm:$0xf]
        %v257 = vld [vmem:[#allocation5 + $0x8] sm:$0xf]
        %v258 = vld [vmem:[#allocation5 + $0xc] sm:$0xf]
        %v259 = vld [vmem:[#allocation5 + $0x10] sm:$0xf]
        %v260 = vld [vmem:[#allocation5 + $0x14] sm:$0xf]
        %v261 = vld [vmem:[#allocation5 + $0x18] sm:$0xf]
        %v262 = vld [vmem:[#allocation5 + $0x1c] sm:$0xf]
        %v263 = vld [vmem:[#allocation5 + $0x20] sm:$0xf]
        %v264 = vld [vmem:[#allocation5 + $0x24] sm:$0xf]
        %v265 = vld [vmem:[#allocation5 + $0x28] sm:$0xf]
        %v266 = vld [vmem:[#allocation5 + $0x2c] sm:$0xf]
        %v267 = vld [vmem:[#allocation5 + $0x30] sm:$0xf]
        %v268 = vld [vmem:[#allocation5 + $0x34] sm:$0xf]
        %v269 = vld [vmem:[#allocation5 + $0x38] sm:$0xf]
        %v270 = vld [vmem:[#allocation5 + $0x3c] sm:$0xf]
        %v287 = vunpack.c.l.b16 %v239
        %v288 = vunpack.c.l.b16 %v240
        %v289 = vunpack.c.l.b16 %v241
        %v290 = vunpack.c.l.b16 %v242
        %v291 = vunpack.c.l.b16 %v243
        %v292 = vunpack.c.l.b16 %v244
        %v293 = vunpack.c.l.b16 %v245
        %v294 = vunpack.c.l.b16 %v246
        %v295 = vunpack.c.l.b16 %v247
        %v296 = vunpack.c.l.b16 %v248
        %v297 = vunpack.c.l.b16 %v249
        %v298 = vunpack.c.l.b16 %v250
        %v299 = vunpack.c.l.b16 %v251
        %v300 = vunpack.c.l.b16 %v252
        %v301 = vunpack.c.l.b16 %v253
        %v302 = vunpack.c.l.b16 %v254
        %v303 = vpack.c.b16 %v288, %v287
        %v304 = vpack.c.b16 %v290, %v289
        %v305 = vpack.c.b16 %v292, %v291
        %v306 = vpack.c.b16 %v294, %v293
        %v307 = vpack.c.b16 %v296, %v295
        %v308 = vpack.c.b16 %v298, %v297
        %v309 = vpack.c.b16 %v300, %v299
        %v310 = vpack.c.b16 %v302, %v301
        %v335 = vunpack.c.l.b16 %v255
        %v336 = vunpack.c.l.b16 %v256
        %v337 = vunpack.c.l.b16 %v257
        %v338 = vunpack.c.l.b16 %v258
        %v339 = vunpack.c.l.b16 %v259
        %v340 = vunpack.c.l.b16 %v260
        %v341 = vunpack.c.l.b16 %v261
        %v342 = vunpack.c.l.b16 %v262
        %v343 = vunpack.c.l.b16 %v263
        %v344 = vunpack.c.l.b16 %v264
        %v345 = vunpack.c.l.b16 %v265
        %v346 = vunpack.c.l.b16 %v266
        %v347 = vunpack.c.l.b16 %v267
        %v348 = vunpack.c.l.b16 %v268
        %v349 = vunpack.c.l.b16 %v269
        %v350 = vunpack.c.l.b16 %v270
        %v351 = vpack.c.b16 %v336, %v335
        %v352 = vpack.c.b16 %v338, %v337
        %v353 = vpack.c.b16 %v340, %v339
        %v354 = vpack.c.b16 %v342, %v341
        %v355 = vpack.c.b16 %v344, %v343
        %v356 = vpack.c.b16 %v346, %v345
        %v357 = vpack.c.b16 %v348, %v347
        %v358 = vpack.c.b16 %v350, %v349
        %367 = vmatpush.bf16.msra.mxu0 %v358
        %368 = vmatpush.bf16.msra.mxu0 %v357
        %369 = vmatpush.bf16.msra.mxu0 %v356
        %370 = vmatpush.bf16.msra.mxu0 %v355
        %371 = vmatpush.bf16.msra.mxu0 %v354
        %372 = vmatpush.bf16.msra.mxu0 %v353
        %373 = vmatpush.bf16.msra.mxu0 %v352
        %374 = vmatpush.bf16.msra.mxu0 %v351
        %375 = vmatmul.bf16.gmra.mxu0 %v303
        %v376 = vpop.f32.mrf.mxu0
        %v377 = vadd.f32 0.0, %v376
        %v378 = vpop.f32.mrf.mxu0
        %v379 = vadd.f32 0.0, %v378
        %380 = vmatmul.bf16.gmra.mxu0 %v304
        %v381 = vpop.f32.mrf.mxu0
        %v382 = vadd.f32 0.0, %v381
        %v383 = vpop.f32.mrf.mxu0
        %v384 = vadd.f32 0.0, %v383
        %385 = vmatmul.bf16.gmra.mxu0 %v305
        %v386 = vpop.f32.mrf.mxu0
        %v387 = vadd.f32 0.0, %v386
        %v388 = vpop.f32.mrf.mxu0
        %v389 = vadd.f32 0.0, %v388
        %390 = vmatmul.bf16.gmra.mxu0 %v306
        %v391 = vpop.f32.mrf.mxu0
        %v392 = vadd.f32 0.0, %v391
        %v393 = vpop.f32.mrf.mxu0
        %v394 = vadd.f32 0.0, %v393
        %395 = vmatmul.bf16.gmra.mxu0 %v307
        %v396 = vpop.f32.mrf.mxu0
        %v397 = vadd.f32 0.0, %v396
        %v398 = vpop.f32.mrf.mxu0
        %v399 = vadd.f32 0.0, %v398
        %400 = vmatmul.bf16.gmra.mxu0 %v308
        %v401 = vpop.f32.mrf.mxu0
        %v402 = vadd.f32 0.0, %v401
        %v403 = vpop.f32.mrf.mxu0
        %v404 = vadd.f32 0.0, %v403
        %405 = vmatmul.bf16.gmra.mxu0 %v309
        %v406 = vpop.f32.mrf.mxu0
        %v407 = vadd.f32 0.0, %v406
        %v408 = vpop.f32.mrf.mxu0
        %v409 = vadd.f32 0.0, %v408
        %410 = vmatmul.bf16.gmra.mxu0 %v310
        %v411 = vpop.f32.mrf.mxu0
        %v412 = vadd.f32 0.0, %v411
        %v413 = vpop.f32.mrf.mxu0
        %v414 = vadd.f32 0.0, %v413
        %415 = vdwg.mxu0
        %416 = vst [vmem:[%s226] sm:$0xff] %v377
        %417 = vst [vmem:[%s226 + $0x8] sm:$0xff] %v379
        %418 = vst [vmem:[%s226 + $0x10] sm:$0xff] %v382
        %419 = vst [vmem:[%s226 + $0x18] sm:$0xff] %v384
        %420 = vst [vmem:[%s226 + $0x20] sm:$0xff] %v387
        %421 = vst [vmem:[%s226 + $0x28] sm:$0xff] %v389
        %422 = vst [vmem:[%s226 + $0x30] sm:$0xff] %v392
        %423 = vst [vmem:[%s226 + $0x38] sm:$0xff] %v394
        %424 = vst [vmem:[%s226 + $0x40] sm:$0xff] %v397
        %425 = vst [vmem:[%s226 + $0x48] sm:$0xff] %v399
        %426 = vst [vmem:[%s226 + $0x50] sm:$0xff] %v402
        %427 = vst [vmem:[%s226 + $0x58] sm:$0xff] %v404
        %428 = vst [vmem:[%s226 + $0x60] sm:$0xff] %v407
        %429 = vst [vmem:[%s226 + $0x68] sm:$0xff] %v409
        %430 = vst [vmem:[%s226 + $0x70] sm:$0xff] %v412
        %431 = vst [vmem:[%s226 + $0x78] sm:$0xff] %v414
        %v432 = vld [vmem:[#allocation8] sm:$0x1]
        %v433 = vadd.f32 %v377, %v379
        %v434 = vadd.f32 %v433, %v382
        %v435 = vadd.f32 %v434, %v384
        %v436 = vadd.f32 %v435, %v387
        %v437 = vadd.f32 %v436, %v389
        %v438 = vadd.f32 %v437, %v392
        %v439 = vadd.f32 %v438, %v394
        %v440 = vadd.f32 %v439, %v397
        %v441 = vadd.f32 %v440, %v399
        %v442 = vadd.f32 %v441, %v402
        %v443 = vadd.f32 %v442, %v404
        %v444 = vadd.f32 %v443, %v407
        %v445 = vadd.f32 %v444, %v409
        %v446 = vadd.f32 %v445, %v412
        %v447 = vadd.f32 %v446, %v414
        %v448 = vrot.slane %v447, 4
        %v449 = vadd.f32 %v447, %v448
        %v450 = vrot.slane %v449, 2
        %v451 = vadd.f32 %v449, %v450
        %v452 = vrot.slane %v451, 1
        %v453 = vadd.f32 %v451, %v452
        %v454 = vadd.f32 %v432, %v453
        %455 = vst [vmem:[#allocation8] sm:$0x1] %v454
        %v456 = vld [vmem:[#allocation10] sm:$0x1]
        %v457 = vmul.f32 %v377, %v377
        %v458 = vmul.f32 %v379, %v379
        %v459 = vmul.f32 %v382, %v382
        %v460 = vmul.f32 %v384, %v384
        %v461 = vmul.f32 %v387, %v387
        %v462 = vmul.f32 %v389, %v389
        %v463 = vmul.f32 %v392, %v392
        %v464 = vmul.f32 %v394, %v394
        %v465 = vmul.f32 %v397, %v397
        %v466 = vmul.f32 %v399, %v399
        %v467 = vmul.f32 %v402, %v402
        %v468 = vmul.f32 %v404, %v404
        %v469 = vmul.f32 %v407, %v407
        %v470 = vmul.f32 %v409, %v409
        %v471 = vmul.f32 %v412, %v412
        %v472 = vmul.f32 %v414, %v414
        %v473 = vadd.f32 %v457, %v458
        %v474 = vadd.f32 %v473, %v459
        %v475 = vadd.f32 %v474, %v460
        %v476 = vadd.f32 %v475, %v461
        %v477 = vadd.f32 %v476, %v462
        %v478 = vadd.f32 %v477, %v463
        %v479 = vadd.f32 %v478, %v464
        %v480 = vadd.f32 %v479, %v465
        %v481 = vadd.f32 %v480, %v466
        %v482 = vadd.f32 %v481, %v467
        %v483 = vadd.f32 %v482, %v468
        %v484 = vadd.f32 %v483, %v469
        %v485 = vadd.f32 %v484, %v470
        %v486 = vadd.f32 %v485, %v471
        %v487 = vadd.f32 %v486, %v472
        %v488 = vrot.slane %v487, 4
        %v489 = vadd.f32 %v487, %v488
        %v490 = vrot.slane %v489, 2
        %v491 = vadd.f32 %v489, %v490
        %v492 = vrot.slane %v491, 1
        %v493 = vadd.f32 %v491, %v492
        %v494 = vadd.f32 %v456, %v493
        %495 = vst [vmem:[#allocation10] sm:$0x1] %v494
        %s496 = sand.u32 %s79, 1
        %s497 = scalar_lea.sflag [#allocation4], %s496
        %s498 = sand.u32 %s79, 1
        %s499 = smul.addr %s498, 128
        %s500 = scalar_lea.vmem [#allocation7], %s499
        // Predicated region
        $region41: #{tpu_custom_call.1} parent=27 // pred_check
          %p501 = pneg %p89
        $region42: #{tpu_custom_call.1} parent=27 // pred_check_branch
          %503 = sbr.rel (%p501) target = $region44
        $region43: #{tpu_custom_call.1} parent=27 // pred_region
          %s504 = smul.u32 16, %s24
          %506 = vsyncadd %s497, 0
          %s507 = smul.addr %s504, 8
          %s508 = scalar_lea.hbm %s2, %s507
          %s509 = sshll.u32 %s500, 4
          %s510 = int_to_ptr.vmem [resolvable:$true] %s509
          %s511 = sshll.u32 %s508, 4
          %s512 = int_to_ptr.hbm [resolvable:$true] %s511
          %517 = dma.vmem_to_hbm [thread:$0]  %s510, 2048, %s512, %s497, 128, 128, 8
        $region44: #{tpu_custom_call.1} parent=27 // pred_fallthru
          _
        // Predicated region
        $region45: #{tpu_custom_call.1} parent=27 // pred_check
          %p518 = pneg %p110
        $region46: #{tpu_custom_call.1} parent=27 // pred_check_branch
          %520 = sbr.rel (%p518) target = $region48
        $region47: #{tpu_custom_call.1} parent=27 // pred_region
          %522 = vsyncadd [#allocation9], 0
          %s524 = sshll.u32 [#allocation8], 4
          %s525 = int_to_ptr.vmem [resolvable:$true] %s524
          %s526 = sshll.u32 %s3, 4
          %s527 = int_to_ptr.hbm [resolvable:$true] %s526
          %529 = dma.vmem_to_hbm [thread:$0]  %s525, 16, %s527, [#allocation9]
        $region48: #{tpu_custom_call.1} parent=27 // pred_fallthru
          _
        // Predicated region
        $region49: #{tpu_custom_call.1} parent=27 // pred_check
          %p530 = pneg %p131
        $region50: #{tpu_custom_call.1} parent=27 // pred_check_branch
          %532 = sbr.rel (%p530) target = $region52
        $region51: #{tpu_custom_call.1} parent=27 // pred_region
          %534 = vsyncadd [#allocation9], 0
          %s536 = sshll.u32 [#allocation10], 4
          %s537 = int_to_ptr.vmem [resolvable:$true] %s536
          %s538 = sshll.u32 %s4, 4
          %s539 = int_to_ptr.hbm [resolvable:$true] %s538
          %541 = dma.vmem_to_hbm [thread:$0]  %s537, 16, %s539, [#allocation9]
        $region52: #{tpu_custom_call.1} parent=27 // pred_fallthru
          _
        // Predicated region
        $region53: #{tpu_custom_call.1} parent=27 // pred_check
          %p542 = pneg %p110
        $region54: #{tpu_custom_call.1} parent=27 // pred_check_branch
          %544 = sbr.rel (%p542) target = $region56
        $region55: #{tpu_custom_call.1} parent=27 // pred_region
          %546 = dma.done [#allocation9], 16
        $region56: #{tpu_custom_call.1} parent=27 // pred_fallthru
          _
        // Predicated region
        $region57: #{tpu_custom_call.1} parent=27 // pred_check
          %p547 = pneg %p131
        $region58: #{tpu_custom_call.1} parent=27 // pred_check_branch
          %549 = sbr.rel (%p547) target = $region60
        $region59: #{tpu_custom_call.1} parent=27 // pred_region
          %551 = dma.done [#allocation9], 16
        $region60: #{tpu_custom_call.1} parent=27 // pred_fallthru
          _
      $region28: #{tpu_custom_call.1} parent=5 // pred_fallthru
        _
      %p552 = scmp.le.s32.totalorder 2, %s19
      // Predicated region
      $region61: #{tpu_custom_call.1} parent=5 // pred_check
        %p553 = pneg %p552
      $region62: #{tpu_custom_call.1} parent=5 // pred_check_branch
        %555 = sbr.rel (%p553) target = $region64
      $region63: #{tpu_custom_call.1} parent=5 // pred_region
        %s556 = ssub.s32 %s19, 2
        // Predicated region
        $region65: #{tpu_custom_call.1} parent=63 // pred_check
          %p557 = pneg %p95
        $region66: #{tpu_custom_call.1} parent=63 // pred_check_branch
          %559 = sbr.rel (%p557) target = $region68
        $region67: #{tpu_custom_call.1} parent=63 // pred_region
          %s560 = sand.u32 %s80, 1
          %s561 = scalar_lea.sflag [#allocation4], %s560
          %s562 = sand.u32 %s80, 1
          %s563 = smul.addr %s562, 128
          %s564 = scalar_lea.vmem [#allocation7], %s563
          %566 = dma.done %s561, 2048
        $region68: #{tpu_custom_call.1} parent=63 // pred_fallthru
          _
      $region64: #{tpu_custom_call.1} parent=5 // pred_fallthru
        _
    $region6: #{tpu_custom_call.1} parent=1 // loop_footer
      %s23 = sadd.s32 1, %s19
    $region7: #{tpu_custom_call.1} parent=1 // loop_footer_branch
      %18 = sbr.rel target = $region3
    $region8: #{tpu_custom_call.1} parent=1 // loop_exit
      _
    %567 = vsyncpa [#allocation3], 1
    %s568 = scalar_lea.sflag [#allocation3], 1
    %569 = vsyncpa %s568, 1
    %570 = vsyncpa [#allocation6], 1
    %571 = vsyncpa [#allocation4], 1
    %s572 = scalar_lea.sflag [#allocation4], 1
    %573 = vsyncpa %s572, 1
    %574 = vsyncpa [#allocation9], 1

</llo_original>
